<compile_context>
chip_gen: v7x
topology: tpu7x:2x2x1
jax: 0.10.0
libtpu: 0.0.40
codegen_flags: <defaults>
</compile_context>

<pallas_src>
import jax
import jax.numpy as jnp
from jax.experimental import pallas as pl
from jax.experimental.pallas import tpu as pltpu


def cls_head_kernel(x_ref, w_ref, b_ref, o_ref, acc_ref):
    """One (batch_tile, hw_tile) grid step.

    x_ref:   (TB, C, THW) feature tile (any float dtype; accumulated in f32)
    w_ref:   (C, n_cls)   transposed Linear weight, pre-scaled by 1/(H*W)
    b_ref:   (1, n_cls)   Linear bias
    o_ref:   (TB, n_cls)  softmax probabilities (same block across the HW axis)
    acc_ref: (TB, C) f32  raw spatial-sum accumulator (VMEM scratch)
    """
    k = pl.program_id(1)

    @pl.when(k == 0)
    def _():
        acc_ref[...] = jnp.zeros_like(acc_ref)

    # Partial global-average-pool: accumulate raw sums over the spatial tile.
    # The 1/(H*W) mean scale is folded into w_ref by the wrapper.
    acc_ref[...] += jnp.sum(x_ref[...].astype(jnp.float32), axis=-1)

    @pl.when(k == pl.num_programs(1) - 1)
    def _():
        logits = jnp.dot(acc_ref[...], w_ref[...],
                         preferred_element_type=jnp.float32) + b_ref[...]
        m = jnp.max(logits, axis=-1, keepdims=True)
        e = jnp.exp(logits - m)
        s = jnp.sum(e, axis=-1, keepdims=True)
        inv = pl.reciprocal(s, approx=True)       # EUP reciprocal (free slot)
        inv = inv * (2.0 - s * inv)               # one Newton step -> f32 accuracy
        o_ref[...] = (e * inv).astype(o_ref.dtype)


def _pick_batch_tile(b):
    """Batch tile: full B when small, else a multiple of 8 that divides B."""
    if b <= 8:
        return b
    for t in range(min(b, 128) // 8 * 8, 0, -8):
        if b % t == 0:
            return t
    return b


def _pick_hw_tile(hw, tb, c, itemsize, max_bytes=4 << 20):
    """HW tile: multiple of 128 dividing HW, capped at ~max_bytes per tile."""
    if hw % 128 != 0:
        return hw                                  # must use full extent
    cap = max(128, (max_bytes // max(1, tb * c * itemsize)) // 128 * 128)
    t = min(hw, cap)
    while hw % t != 0:
        t -= 128
    return t


def cls_head(features, weight, bias):
    """features: (B, C, H, W) float, weight: (n_cls, C) (PyTorch Linear), bias: (n_cls,)."""
    B, C, H, W = features.shape
    n_cls = weight.shape[0]
    hw = H * W
    x3 = features.reshape(B, C, hw)

    tb = _pick_batch_tile(B)
    thw = _pick_hw_tile(hw, tb, C, x3.dtype.itemsize)
    nb, nhw = B // tb, hw // thw

    # Fold the 1/(H*W) pooling scale into the transposed Linear weight.
    wT = (jnp.transpose(weight).astype(jnp.float32)) / float(hw)   # (C, n_cls)
    b2 = bias.reshape(1, n_cls).astype(jnp.float32)

    return pl.pallas_call(
        cls_head_kernel,
        out_shape=jax.ShapeDtypeStruct((B, n_cls), jnp.float32),
        grid_spec=pltpu.PrefetchScalarGridSpec(
            num_scalar_prefetch=0,
            grid=(nb, nhw),                        # reduction axis last
            in_specs=[
                pl.BlockSpec((tb, C, thw), lambda b, k: (b, 0, k)),
                pl.BlockSpec((C, n_cls), lambda b, k: (0, 0)),
                pl.BlockSpec((1, n_cls), lambda b, k: (0, 0)),
            ],
            out_specs=pl.BlockSpec((tb, n_cls), lambda b, k: (b, 0)),
            scratch_shapes=[pltpu.VMEM((tb, C), jnp.float32)],
        ),
        compiler_params=pltpu.CompilerParams(
            dimension_semantics=("parallel", "arbitrary"),
        ),
    )(x3, wT, b2)


def cls_head_ref(features, weight, bias):
    """Pure-JAX reference mirroring the PyTorch forward."""
    pooled = jnp.mean(features.astype(jnp.float32), axis=(2, 3))   # AdaptiveAvgPool2d(1)
    logits = pooled @ weight.T.astype(jnp.float32) + bias          # nn.Linear
    return jax.nn.softmax(logits, axis=1)                          # nn.Softmax(dim=1)


if __name__ == "__main__":
    key = jax.random.PRNGKey(0)
    k_x, k_w, k_b = jax.random.split(key, 3)

    B, C, H, W = 2, 64, 16, 16                    # C=64 required by Linear(64, 2)
    n_cls = 2
    features = jax.random.normal(k_x, (B, C, H, W), dtype=jnp.float32)

    # Deterministic synthetic parameters (PyTorch Linear shapes: weight (2, 64), bias (2,))
    bound = 1.0 / (C ** 0.5)
    weight = jax.random.uniform(k_w, (n_cls, C), minval=-bound, maxval=bound, dtype=jnp.float32)
    bias = jax.random.uniform(k_b, (n_cls,), minval=-bound, maxval=bound, dtype=jnp.float32)

    out = jax.block_until_ready(cls_head(features, weight, bias))
    ref = cls_head_ref(features, weight, bias)

    assert out.shape == (B, n_cls)
    assert jnp.allclose(out, ref, atol=1e-5, rtol=1e-5), "mismatch vs reference"
    assert jnp.allclose(jnp.sum(out, axis=1), 1.0, atol=1e-5), "softmax rows must sum to 1"

    print("KERNEL_OK")
</pallas_src>

<mosaic_0001>
module attributes {stable_mosaic.version = 11 : i64} {
  func.func @cls_head_kernel(%arg0: i32, %arg1: i32, %arg2: memref<2x64x256xf32, #tpu.memory_space<vmem>>, %arg3: memref<64x2xf32, #tpu.memory_space<vmem>>, %arg4: memref<1x2xf32, #tpu.memory_space<vmem>>, %arg5: memref<2x2xf32, #tpu.memory_space<vmem>>, %arg6: memref<2x64xf32, #tpu.memory_space<vmem>>) attributes {dimension_semantics = [#tpu.dimension_semantics<parallel>, #tpu.dimension_semantics<arbitrary>], iteration_bounds = array<i64: 1, 1>, scalar_prefetch = 0 : i64, scratch_operands = 1 : i64, tpu.core_type = #tpu.core_type<tc>, window_params = [{transform_indices = @transform_0, window_bounds = array<i64: 2, 64, 256>}, {pipeline_mode = #tpu.pipeline_mode<synchronous>, transform_indices = @transform_1, window_bounds = array<i64: 64, 2>}, {pipeline_mode = #tpu.pipeline_mode<synchronous>, transform_indices = @transform_2, window_bounds = array<i64: 1, 2>}, {transform_indices = @transform_3, window_bounds = array<i64: 2, 2>}]} {
    %c0_i32 = arith.constant 0 : i32
    %0 = arith.cmpi eq, %arg1, %c0_i32 : i32
    %1 = arith.extui %0 : i1 to i32
    %c0_i32_0 = arith.constant 0 : i32
    %2 = arith.cmpi ne, %1, %c0_i32_0 : i32
    scf.if %2 {
      %cst_9 = arith.constant 0.000000e+00 : f32
      %11 = vector.broadcast %cst_9 : f32 to vector<2x64xf32>
      %c0_10 = arith.constant 0 : index
      %c0_11 = arith.constant 0 : index
      %12 = vector.load %arg6[%c0_10, %c0_11] : memref<2x64xf32, #tpu.memory_space<vmem>>, vector<2x64xf32>
      tpu.vector_store %arg6[%c0_10, %c0_11], %11 {strides = array<i32>} : memref<2x64xf32, #tpu.memory_space<vmem>>, vector<2x64xf32>,
    } else {
    }
    %c0 = arith.constant 0 : index
    %c0_1 = arith.constant 0 : index
    %3 = vector.load %arg6[%c0, %c0_1] : memref<2x64xf32, #tpu.memory_space<vmem>>, vector<2x64xf32>
    %c0_2 = arith.constant 0 : index
    %c0_3 = arith.constant 0 : index
    %c0_4 = arith.constant 0 : index
    %4 = vector.load %arg2[%c0_2, %c0_3, %c0_4] : memref<2x64x256xf32, #tpu.memory_space<vmem>>, vector<2x64x256xf32>
    %cst = arith.constant dense<0.000000e+00> : vector<2x64xf32>
    %5 = vector.multi_reduction <add>, %4, %cst [2] : vector<2x64x256xf32> to vector<2x64xf32>
    %6 = arith.addf %3, %5 : vector<2x64xf32>
    %c0_5 = arith.constant 0 : index
    %c0_6 = arith.constant 0 : index
    %7 = vector.load %arg6[%c0_5, %c0_6] : memref<2x64xf32, #tpu.memory_space<vmem>>, vector<2x64xf32>
    tpu.vector_store %arg6[%c0_5, %c0_6], %6 {strides = array<i32>} : memref<2x64xf32, #tpu.memory_space<vmem>>, vector<2x64xf32>,
    %c0_i32_7 = arith.constant 0 : i32
    %8 = arith.cmpi eq, %arg1, %c0_i32_7 : i32
    %9 = arith.extui %8 : i1 to i32
    %c0_i32_8 = arith.constant 0 : i32
    %10 = arith.cmpi ne, %9, %c0_i32_8 : i32
    scf.if %10 {
      %c0_9 = arith.constant 0 : index
      %c0_10 = arith.constant 0 : index
      %11 = vector.load %arg6[%c0_9, %c0_10] : memref<2x64xf32, #tpu.memory_space<vmem>>, vector<2x64xf32>
      %c0_11 = arith.constant 0 : index
      %c0_12 = arith.constant 0 : index
      %12 = vector.load %arg3[%c0_11, %c0_12] : memref<64x2xf32, #tpu.memory_space<vmem>>, vector<64x2xf32>
      %cst_13 = arith.constant dense<0.000000e+00> : vector<2x2xf32>
      %13 = tpu.matmul %11, %12, %cst_13 {dimension_numbers = #tpu.dot_dimension_numbers<[1], [0], [0], [1], [0, 0, 1, 1], [], []>} : vector<2x64xf32>, vector<64x2xf32>, vector<2x2xf32> -> vector<2x2xf32>
      %c0_14 = arith.constant 0 : index
      %c0_15 = arith.constant 0 : index
      %14 = vector.load %arg4[%c0_14, %c0_15] : memref<1x2xf32, #tpu.memory_space<vmem>>, vector<1x2xf32>
      %15 = vector.broadcast %14 : vector<1x2xf32> to vector<2x2xf32>
      %16 = arith.addf %13, %15 : vector<2x2xf32>
      %cst_16 = arith.constant dense<0xFF800000> : vector<2xf32>
      %17 = vector.multi_reduction <maximumf>, %16, %cst_16 [1] : vector<2x2xf32> to vector<2xf32>
      %18 = vector.shape_cast %17 : vector<2xf32> to vector<2x1xf32>
      %19 = vector.broadcast %18 : vector<2x1xf32> to vector<2x2xf32>
      %20 = arith.subf %16, %19 : vector<2x2xf32>
      %21 = math.exp %20 : vector<2x2xf32>
      %cst_17 = arith.constant dense<0.000000e+00> : vector<2xf32>
      %22 = vector.multi_reduction <add>, %21, %cst_17 [1] : vector<2x2xf32> to vector<2xf32>
      %23 = vector.shape_cast %22 : vector<2xf32> to vector<2x1xf32>
      %24 = tpu.reciprocal %23 {approx = true} : vector<2x1xf32> -> vector<2x1xf32>
      %25 = arith.mulf %23, %24 : vector<2x1xf32>
      %cst_18 = arith.constant 2.000000e+00 : f32
      %26 = vector.broadcast %cst_18 : f32 to vector<2x1xf32>
      %27 = arith.subf %26, %25 : vector<2x1xf32>
      %28 = arith.mulf %24, %27 : vector<2x1xf32>
      %29 = vector.broadcast %28 : vector<2x1xf32> to vector<2x2xf32>
      %30 = arith.mulf %21, %29 : vector<2x2xf32>
      %c0_19 = arith.constant 0 : index
      %c0_20 = arith.constant 0 : index
      %31 = vector.load %arg5[%c0_19, %c0_20] : memref<2x2xf32, #tpu.memory_space<vmem>>, vector<2x2xf32>
      tpu.vector_store %arg5[%c0_19, %c0_20], %30 {strides = array<i32>} : memref<2x2xf32, #tpu.memory_space<vmem>>, vector<2x2xf32>,
    } else {
    }
    return
  }
  func.func @transform_0(%arg0: i32, %arg1: i32) -> (i32, i32, i32) {
    %c0_i32 = arith.constant 0 : i32
    %c0_i32_0 = arith.constant 0 : i32
    return %arg0, %c0_i32, %arg1 : i32, i32, i32
  }
  func.func @transform_1(%arg0: i32, %arg1: i32) -> (i32, i32) {
    %c0_i32 = arith.constant 0 : i32
    %c0_i32_0 = arith.constant 0 : i32
    %c0_i32_1 = arith.constant 0 : i32
    return %c0_i32, %c0_i32_0 : i32, i32
  }
  func.func @transform_2(%arg0: i32, %arg1: i32) -> (i32, i32) {
    %c0_i32 = arith.constant 0 : i32
    %c0_i32_0 = arith.constant 0 : i32
    %c0_i32_1 = arith.constant 0 : i32
    return %c0_i32, %c0_i32_0 : i32, i32
  }
  func.func @transform_3(%arg0: i32, %arg1: i32) -> (i32, i32) {
    %c0_i32 = arith.constant 0 : i32
    %c0_i32_0 = arith.constant 0 : i32
    return %arg0, %c0_i32 : i32, i32
  }
}

</mosaic_0001>

<llo_original>
// kernel: tpu_custom_call.1
$region0: #{tpu_custom_call.1}
  #allocation0 [shape = 'u32[]', space=smem, size = 0x4, offset = 0x4, fixed_abs, tag = 'smem constant byte address 0x4 - core index']
  #allocation1 [shape = 'u32[144,128]{1,0:T(1,128)}', space=vmem, size = 0x12000, scoped, tag = 'internal scratch']
  #allocation2 [shape = 'f32[2,64]{1,0:T(2,128)}', space=vmem, size = 0x400, scoped, tag = 'scratch operand']
  %s0 = inlined_call_operand.hbm [shape: f32[2,64,256], index: 0, kind: input, shape index: {}]
  %s1 = inlined_call_operand.vmem [shape: f32[64,2], index: 1, kind: input, shape index: {}]
  %s2 = inlined_call_operand.vmem [shape: f32[1,2], index: 2, kind: input, shape index: {}]
  %s3 = inlined_call_operand.hbm [shape: f32[2,2], index: 3, kind: output, shape index: {}]
  %s4 = sld [smem:[#allocation0]]
  $region34: #{tpu_custom_call.1} parent=0
    _
  %s6 = ssub.s32 1, %s4
  %s7 = scalar_select 0, %s6, %s4
  $region1: #{tpu_custom_call.1} parent=0
    #allocation3 [shape = 'u8[131072]{0}', space=vmem, size = 0x20000, scoped, tag = 'input window, operand 0, single buffered']
    #allocation4 [shape = 's32[1]{0}', space=sflag, size = 0x4, scoped, tag = 'scoped memory for tpu_custom_call.1']
    #allocation5 [shape = 's32[1]{0}', space=sflag, size = 0x4, scoped, tag = 'scoped memory for tpu_custom_call.1']
    #allocation6 [shape = 'u8[1024]{0}', space=vmem, size = 0x400, scoped, tag = 'output window, operand 0, single buffered']
    %8 = vsyncpa [#allocation4], 0
    %9 = vsyncpa [#allocation5], 0
    // Predicated region
    $region2: #{tpu_custom_call.1} parent=1 // pred_check
      _
    $region3: #{tpu_custom_call.1} parent=1 // pred_check_branch
      %11 = sbr.rel (0) target = $region5
    $region4: #{tpu_custom_call.1} parent=1 // pred_region
      %s13 = ssub.s32 4096, 4096
      %14 = vsyncadd [#allocation4], %s13
      %s15 = sshll.u32 [#allocation3], 4
      %s16 = int_to_ptr.vmem [resolvable:$true] %s15
      %21 = dma.hbm_to_vmem [thread:$0]  %s0, 4096, %s16, [#allocation4], 256, 256, 16
    $region5: #{tpu_custom_call.1} parent=1 // pred_fallthru
      _
    // Predicated region
    $region6: #{tpu_custom_call.1} parent=1 // pred_check
      _
    $region7: #{tpu_custom_call.1} parent=1 // pred_check_branch
      %23 = sbr.rel (0) target = $region9
    $region8: #{tpu_custom_call.1} parent=1 // pred_region
      _
    $region9: #{tpu_custom_call.1} parent=1 // pred_fallthru
      _
    // Predicated region
    $region10: #{tpu_custom_call.1} parent=1 // pred_check
      _
    $region11: #{tpu_custom_call.1} parent=1 // pred_check_branch
      %25 = sbr.rel (0) target = $region13
    $region12: #{tpu_custom_call.1} parent=1 // pred_region
      _
    $region13: #{tpu_custom_call.1} parent=1 // pred_fallthru
      _
    // Predicated region
    $region14: #{tpu_custom_call.1} parent=1 // pred_check
      _
    $region15: #{tpu_custom_call.1} parent=1 // pred_check_branch
      %27 = sbr.rel (0) target = $region17
    $region16: #{tpu_custom_call.1} parent=1 // pred_region
      %28 = dma.done [#allocation4], 4096
    $region17: #{tpu_custom_call.1} parent=1 // pred_fallthru
      _
    %p29 = scmp.eq.s32.totalorder 0, 0
    // Predicated region
    $region18: #{tpu_custom_call.1} parent=1 // pred_check
      %p30 = pneg %p29
    $region19: #{tpu_custom_call.1} parent=1 // pred_check_branch
      %32 = sbr.rel (%p30) target = $region21
    $region20: #{tpu_custom_call.1} parent=1 // pred_region
      %vm33 = vcmask 517120
      %34 = vst.msk [vmem:[#allocation2] sm:$0x3] %vm33, 0.0
    $region21: #{tpu_custom_call.1} parent=1 // pred_fallthru
      _
    %v35 = vld [vmem:[#allocation2] sm:$0x3]
    %v36 = vld [vmem:[#allocation3] sm:$0xff]
    %v37 = vld [vmem:[#allocation3 + $0x8] sm:$0xff]
    %v38 = vld [vmem:[#allocation3 + $0x10] sm:$0xff]
    %v39 = vld [vmem:[#allocation3 + $0x18] sm:$0xff]
    %v40 = vld [vmem:[#allocation3 + $0x20] sm:$0xff]
    %v41 = vld [vmem:[#allocation3 + $0x28] sm:$0xff]
    %v42 = vld [vmem:[#allocation3 + $0x30] sm:$0xff]
    %v43 = vld [vmem:[#allocation3 + $0x38] sm:$0xff]
    %v44 = vld [vmem:[#allocation3 + $0x40] sm:$0xff]
    %v45 = vld [vmem:[#allocation3 + $0x48] sm:$0xff]
    %v46 = vld [vmem:[#allocation3 + $0x50] sm:$0xff]
    %v47 = vld [vmem:[#allocation3 + $0x58] sm:$0xff]
    %v48 = vld [vmem:[#allocation3 + $0x60] sm:$0xff]
    %v49 = vld [vmem:[#allocation3 + $0x68] sm:$0xff]
    %v50 = vld [vmem:[#allocation3 + $0x70] sm:$0xff]
    %v51 = vld [vmem:[#allocation3 + $0x78] sm:$0xff]
    %v52 = vld [vmem:[#allocation3 + $0x80] sm:$0xff]
    %v53 = vld [vmem:[#allocation3 + $0x88] sm:$0xff]
    %v54 = vld [vmem:[#allocation3 + $0x90] sm:$0xff]
    %v55 = vld [vmem:[#allocation3 + $0x98] sm:$0xff]
    %v56 = vld [vmem:[#allocation3 + $0xa0] sm:$0xff]
    %v57 = vld [vmem:[#allocation3 + $0xa8] sm:$0xff]
    %v58 = vld [vmem:[#allocation3 + $0xb0] sm:$0xff]
    %v59 = vld [vmem:[#allocation3 + $0xb8] sm:$0xff]
    %v60 = vld [vmem:[#allocation3 + $0xc0] sm:$0xff]
    %v61 = vld [vmem:[#allocation3 + $0xc8] sm:$0xff]
    %v62 = vld [vmem:[#allocation3 + $0xd0] sm:$0xff]
    %v63 = vld [vmem:[#allocation3 + $0xd8] sm:$0xff]
    %v64 = vld [vmem:[#allocation3 + $0xe0] sm:$0xff]
    %v65 = vld [vmem:[#allocation3 + $0xe8] sm:$0xff]
    %v66 = vld [vmem:[#allocation3 + $0xf0] sm:$0xff]
    %v67 = vld [vmem:[#allocation3 + $0xf8] sm:$0xff]
    %v68 = vadd.f32 %v36, %v37
    %69 = vadd.xlane.f32.xlu0 %v68
    %v70 = vpop.xlane.xlu0 %69
    %v71 = vadd.f32 %v38, %v39
    %72 = vadd.xlane.f32.xlu0 %v71
    %v73 = vpop.xlane.xlu0 %72
    %v74 = vadd.f32 %v40, %v41
    %75 = vadd.xlane.f32.xlu0 %v74
    %v76 = vpop.xlane.xlu0 %75
    %v77 = vadd.f32 %v42, %v43
    %78 = vadd.xlane.f32.xlu0 %v77
    %v79 = vpop.xlane.xlu0 %78
    %v80 = vadd.f32 %v44, %v45
    %81 = vadd.xlane.f32.xlu0 %v80
    %v82 = vpop.xlane.xlu0 %81
    %v83 = vadd.f32 %v46, %v47
    %84 = vadd.xlane.f32.xlu0 %v83
    %v85 = vpop.xlane.xlu0 %84
    %v86 = vadd.f32 %v48, %v49
    %87 = vadd.xlane.f32.xlu0 %v86
    %v88 = vpop.xlane.xlu0 %87
    %v89 = vadd.f32 %v50, %v51
    %90 = vadd.xlane.f32.xlu0 %v89
    %v91 = vpop.xlane.xlu0 %90
    %v92 = vadd.f32 %v52, %v53
    %93 = vadd.xlane.f32.xlu0 %v92
    %v94 = vpop.xlane.xlu0 %93
    %v95 = vadd.f32 %v54, %v55
    %96 = vadd.xlane.f32.xlu0 %v95
    %v97 = vpop.xlane.xlu0 %96
    %v98 = vadd.f32 %v56, %v57
    %99 = vadd.xlane.f32.xlu0 %v98
    %v100 = vpop.xlane.xlu0 %99
    %v101 = vadd.f32 %v58, %v59
    %102 = vadd.xlane.f32.xlu0 %v101
    %v103 = vpop.xlane.xlu0 %102
    %v104 = vadd.f32 %v60, %v61
    %105 = vadd.xlane.f32.xlu0 %v104
    %v106 = vpop.xlane.xlu0 %105
    %v107 = vadd.f32 %v62, %v63
    %108 = vadd.xlane.f32.xlu0 %v107
    %v109 = vpop.xlane.xlu0 %108
    %v110 = vadd.f32 %v64, %v65
    %111 = vadd.xlane.f32.xlu0 %v110
    %v112 = vpop.xlane.xlu0 %111
    %v113 = vadd.f32 %v66, %v67
    %114 = vadd.xlane.f32.xlu0 %v113
    %v115 = vpop.xlane.xlu0 %114
    %v132 = vlaneseq
    %v133 = vand.u32 %v132, 127
    %v134 = vlaneseq
    %v135 = vshrl.u32 %v134, 7
    %v136 = vsub.s32 %v133, %v135
    %v137 = vrot.slane %v70, %v136
    %v138 = vadd.s32 %v133, 4294967288
    %v139 = vlaneseq
    %v140 = vshrl.u32 %v139, 7
    %v141 = vsub.s32 %v138, %v140
    %v142 = vrot.slane %v73, %v141
    %vm143 = vcmask 130112
    %v144 = vsel %vm143, %v142, %v137
    %v145 = vadd.s32 %v133, 4294967280
    %v146 = vlaneseq
    %v147 = vshrl.u32 %v146, 7
    %v148 = vsub.s32 %v145, %v147
    %v149 = vrot.slane %v76, %v148
    %vm150 = vcmask 195712
    %v151 = vsel %vm150, %v149, %v144
    %v152 = vadd.s32 %v133, 4294967272
    %v153 = vlaneseq
    %v154 = vshrl.u32 %v153, 7
    %v155 = vsub.s32 %v152, %v154
    %v156 = vrot.slane %v79, %v155
    %vm157 = vcmask 261312
    %v158 = vsel %vm157, %v156, %v151
    %v159 = vadd.s32 %v133, 4294967264
    %v160 = vlaneseq
    %v161 = vshrl.u32 %v160, 7
    %v162 = vsub.s32 %v159, %v161
    %v163 = vrot.slane %v82, %v162
    %vm164 = vcmask 326912
    %v165 = vsel %vm164, %v163, %v158
    %v166 = vadd.s32 %v133, 4294967256
    %v167 = vlaneseq
    %v168 = vshrl.u32 %v167, 7
    %v169 = vsub.s32 %v166, %v168
    %v170 = vrot.slane %v85, %v169
    %vm171 = vcmask 392512
    %v172 = vsel %vm171, %v170, %v165
    %v173 = vadd.s32 %v133, 4294967248
    %v174 = vlaneseq
    %v175 = vshrl.u32 %v174, 7
    %v176 = vsub.s32 %v173, %v175
    %v177 = vrot.slane %v88, %v176
    %vm178 = vcmask 458112
    %v179 = vsel %vm178, %v177, %v172
    %v180 = vadd.s32 %v133, 4294967240
    %v181 = vlaneseq
    %v182 = vshrl.u32 %v181, 7
    %v183 = vsub.s32 %v180, %v182
    %v184 = vrot.slane %v91, %v183
    %vm185 = vcmask 523712
    %v186 = vsel %vm185, %v184, %v179
    %v187 = vlaneseq
    %v188 = vshrl.u32 %v187, 7
    %v189 = vsub.s32 %v133, %v188
    %v190 = vrot.slane %v94, %v189
    %v191 = vlaneseq
    %v192 = vshrl.u32 %v191, 7
    %v193 = vsub.s32 %v138, %v192
    %v194 = vrot.slane %v97, %v193
    %v195 = vsel %vm143, %v194, %v190
    %v196 = vlaneseq
    %v197 = vshrl.u32 %v196, 7
    %v198 = vsub.s32 %v145, %v197
    %v199 = vrot.slane %v100, %v198
    %v200 = vsel %vm150, %v199, %v195
    %v201 = vlaneseq
    %v202 = vshrl.u32 %v201, 7
    %v203 = vsub.s32 %v152, %v202
    %v204 = vrot.slane %v103, %v203
    %v205 = vsel %vm157, %v204, %v200
    %v206 = vlaneseq
    %v207 = vshrl.u32 %v206, 7
    %v208 = vsub.s32 %v159, %v207
    %v209 = vrot.slane %v106, %v208
    %v210 = vsel %vm164, %v209, %v205
    %v211 = vlaneseq
    %v212 = vshrl.u32 %v211, 7
    %v213 = vsub.s32 %v166, %v212
    %v214 = vrot.slane %v109, %v213
    %v215 = vsel %vm171, %v214, %v210
    %v216 = vlaneseq
    %v217 = vshrl.u32 %v216, 7
    %v218 = vsub.s32 %v173, %v217
    %v219 = vrot.slane %v112, %v218
    %v220 = vsel %vm178, %v219, %v215
    %v221 = vlaneseq
    %v222 = vshrl.u32 %v221, 7
    %v223 = vsub.s32 %v180, %v222
    %v224 = vrot.slane %v115, %v223
    %v225 = vsel %vm185, %v224, %v220
    %vm226 = vcmask 1041409
    %v227 = vsel %vm226, %v225, %v186
    %v229 = vadd.f32 %v35, %v227
    %vm230 = vcmask 517120
    %231 = vst.msk [vmem:[#allocation2] sm:$0x3] %vm230, %v229
    // Predicated region
    $region22: #{tpu_custom_call.1} parent=1 // pred_check
      %p232 = pneg %p29
    $region23: #{tpu_custom_call.1} parent=1 // pred_check_branch
      %234 = sbr.rel (%p232) target = $region25
    $region24: #{tpu_custom_call.1} parent=1 // pred_region
      %v235 = vld [vmem:[#allocation2] sm:$0x3]
      %v236 = vld [vmem:[%s1] sm:$0xff]
      %v237 = vld [vmem:[%s1 + $0x8] sm:$0xff]
      %v238 = vld [vmem:[%s1 + $0x10] sm:$0xff]
      %v239 = vld [vmem:[%s1 + $0x18] sm:$0xff]
      %v240 = vld [vmem:[%s1 + $0x20] sm:$0xff]
      %v241 = vld [vmem:[%s1 + $0x28] sm:$0xff]
      %v242 = vld [vmem:[%s1 + $0x30] sm:$0xff]
      %v243 = vld [vmem:[%s1 + $0x38] sm:$0xff]
      %v244 = vld [vmem:[%s2] sm:$0x1]
      %v246 = vlaneseq
      %v247 = vshrl.u32 %v246, 7
      %v248 = vsub.s32 0, %v247
      %v249 = vrot.slane %v244, %v248
      %vm251 = vcmask 523264
      %v253 = vsel %vm251, %v235, 0
      %255 = vmatprep.subr.mxu0 0.0
      %256 = vmatpush1.msra.mxu0 %v236
      %257 = vmatprep.subr.mxu0 0.0
      %258 = vmatpush1.msra.mxu0 %v237
      %259 = vmatprep.subr.mxu0 0.0
      %260 = vmatpush1.msra.mxu0 %v238
      %261 = vmatprep.subr.mxu0 0.0
      %262 = vmatpush1.msra.mxu0 %v239
      %263 = vmatprep.subr.mxu0 0.0
      %264 = vmatpush1.msra.mxu0 %v240
      %265 = vmatprep.subr.mxu0 0.0
      %266 = vmatpush1.msra.mxu0 %v241
      %267 = vmatprep.subr.mxu0 0.0
      %268 = vmatpush1.msra.mxu0 %v242
      %269 = vmatprep.subr.mxu0 0.0
      %270 = vmatpush1.msra.mxu0 %v243
      %271 = vmatprep.subr.mxu0 0.0
      %272 = vmatpush1.msra.mxu0 0.0
      %273 = vmatprep.subr.mxu0 0.0
      %274 = vmatpush1.msra.mxu0 0.0
      %275 = vmatprep.subr.mxu0 0.0
      %276 = vmatpush1.msra.mxu0 0.0
      %277 = vmatprep.subr.mxu0 0.0
      %278 = vmatpush1.msra.mxu0 0.0
      %279 = vmatprep.subr.mxu0 0.0
      %280 = vmatpush1.msra.mxu0 0.0
      %281 = vmatprep.subr.mxu0 0.0
      %282 = vmatpush1.msra.mxu0 0.0
      %283 = vmatprep.subr.mxu0 0.0
      %284 = vmatpush1.msra.mxu0 0.0
      %285 = vmatprep.subr.mxu0 0.0
      %286 = vmatpush1.msra.mxu0 0.0
      %287 = vmatprep.subr.mxu0 0.0
      %288 = vmatpush1.msra.mxu0 0.0
      %289 = vmatprep.subr.mxu0 0.0
      %290 = vmatpush1.msra.mxu0 0.0
      %291 = vmatprep.subr.mxu0 0.0
      %292 = vmatpush1.msra.mxu0 0.0
      %293 = vmatprep.subr.mxu0 0.0
      %294 = vmatpush1.msra.mxu0 0.0
      %295 = vmatprep.subr.mxu0 0.0
      %296 = vmatpush1.msra.mxu0 0.0
      %297 = vmatprep.subr.mxu0 0.0
      %298 = vmatpush1.msra.mxu0 0.0
      %299 = vmatprep.subr.mxu0 0.0
      %300 = vmatpush1.msra.mxu0 0.0
      %301 = vmatprep.subr.mxu0 0.0
      %302 = vmatpush1.msra.mxu0 0.0
      %303 = vmatprep.subr.mxu0 0.0
      %304 = vmatpush1.msra.mxu0 0.0
      %305 = vmatprep.subr.mxu0 0.0
      %306 = vmatpush1.msra.mxu0 0.0
      %307 = vmatprep.subr.mxu0 0.0
      %308 = vmatpush1.msra.mxu0 0.0
      %309 = vmatprep.subr.mxu0 0.0
      %310 = vmatpush1.msra.mxu0 0.0
      %311 = vmatprep.subr.mxu0 0.0
      %312 = vmatpush1.msra.mxu0 0.0
      %313 = vmatprep.subr.mxu0 0.0
      %314 = vmatpush1.msra.mxu0 0.0
      %315 = vmatprep.subr.mxu0 0.0
      %316 = vmatpush1.msra.mxu0 0.0
      %317 = vmatprep.subr.mxu0 0.0
      %318 = vmatpush1.msra.mxu0 0.0
      %319 = vmatprep.mubr.f32.mxu0 0.0
      %320 = vmatmul.mubr.f32.gmra.mrb[0].mxu0 %v253
      %v321 = vpop.f32.mrb[0].mxu0
      %v322 = vadd.f32 %v249, %v321
      %v323 = vpop.f32.mrb[0].mxu0
      %324 = vdwg.mxu0
      %vm325 = vcmask 9216
      %v326 = vsel %vm325, %v322, -inf
      %327 = vmax.xlane.f32.xlu0 %v326
      %v328 = vpop.xlane.xlu0 %327
      %v329 = vsub.f32 %v322, %v328
      %v330 = vmul.f32 %v329, 1.442695
      %v331 = vpow.pop %v330
      %v332 = vsel %vm325, %v331, 0.0
      %333 = vadd.xlane.f32.xlu0 %v332
      %v334 = vpop.xlane.xlu0 %333
      %v335 = vrcp.pop %v334
      %v336 = vmul.f32 %v334, %v335
      %v337 = vsub.f32 2.0, %v336
      %v338 = vmul.f32 %v335, %v337
      %v339 = vmul.f32 %v331, %v338
      %340 = vst.msk [vmem:[#allocation6] sm:$0x3] %vm325, %v339
    $region25: #{tpu_custom_call.1} parent=1 // pred_fallthru
      _
    // Predicated region
    $region26: #{tpu_custom_call.1} parent=1 // pred_check
      _
    $region27: #{tpu_custom_call.1} parent=1 // pred_check_branch
      %342 = sbr.rel (0) target = $region29
    $region28: #{tpu_custom_call.1} parent=1 // pred_region
      %s344 = ssub.s32 32, 32
      %345 = vsyncadd [#allocation5], %s344
      %s347 = sshll.u32 [#allocation6], 4
      %s348 = int_to_ptr.vmem [resolvable:$true] %s347
      %350 = dma.vmem_to_hbm [thread:$0]  %s348, 32, %s3, [#allocation5]
    $region29: #{tpu_custom_call.1} parent=1 // pred_fallthru
      _
    // Predicated region
    $region30: #{tpu_custom_call.1} parent=1 // pred_check
      _
    $region31: #{tpu_custom_call.1} parent=1 // pred_check_branch
      %352 = sbr.rel (0) target = $region33
    $region32: #{tpu_custom_call.1} parent=1 // pred_region
      %353 = dma.done [#allocation5], 32
    $region33: #{tpu_custom_call.1} parent=1 // pred_fallthru
      _
    %354 = vsyncpa [#allocation4], 1
    %355 = vsyncpa [#allocation5], 1

</llo_original>
